<compile_context>
chip_gen: v7x
topology: tpu7x:2x2x1
jax: 0.10.0
libtpu: 0.0.40
codegen_flags: <defaults>
</compile_context>

<pallas_src>
import functools

import jax
import jax.numpy as jnp
from jax import lax
from jax.experimental import pallas as pl
from jax.experimental.pallas import tpu as pltpu


def _bert_bias_hard_kernel(s_ref, sT_ref, vt_ref, vtT_pad_ref, tailT_pad_ref,
                           prob_t_ref, prob_tail_ref,
                           loss_ref, pscore_ref, *, num_neg, plus):
    a = s_ref.shape[0]
    a_pad = vtT_pad_ref.shape[1]

    s = s_ref[...]

    # Canonical (A,B)@(B,.) MXU matmuls; f32 accumulation on the MXU.
    #   p_t:    scores against v_t (lane-padded to Apad)     -> returned logits
    #   p_tail: scores against fused [v_h | v_e_hard | 0pad]  -> denominator only
    p_t = jnp.dot(s, vtT_pad_ref[...], preferred_element_type=jnp.float32)    # (A, Apad)
    p_tail = jnp.dot(s, tailT_pad_ref[...], preferred_element_type=jnp.float32)  # (A, Tpad)

    # Diagonal mask over the (lane-padded) v_t block only -- the diagonal of
    # the full (A, N) score matrix lives entirely inside its first A columns.
    row_p = lax.broadcasted_iota(jnp.int32, (a, a_pad), 0)
    col_p = lax.broadcasted_iota(jnp.int32, (a, a_pad), 1)
    diag_p = row_p == col_p

    # p_score -= zeros(...).fill_diagonal_(1)
    p_t = p_t - jnp.where(diag_p, 1.0, 0.0)

    # Lane-dense full-block store of the returned logits (wrapper slices [:, :A]).
    pscore_ref[...] = p_t

    # diag(p_score) == log(nu): lane-axis extraction, reused by the CE branch.
    diag_vals = jnp.sum(jnp.where(diag_p, p_t, 0.0), axis=1, keepdims=True)   # (A, 1)
    nu = jnp.exp(diag_vals)                                                   # (A, 1)

    # de = sum_j exp(p_score[i, j]) * prob[i, j] - nu, accumulated per segment.
    # Padded lanes have prob == 0, so exp(0) * 0 contributes nothing.
    de = (jnp.sum(jnp.exp(p_t) * prob_t_ref[...].astype(jnp.float32),
                  axis=1, keepdims=True)
          + jnp.sum(jnp.exp(p_tail) * prob_tail_ref[...].astype(jnp.float32),
                    axis=1, keepdims=True)
          - nu)

    loss = -jnp.mean(jnp.log(nu / (nu + num_neg * de)))

    if plus:
        # CrossEntropyLoss(p_score[:, :A].T, arange(A)) =
        #   mean_j [ logsumexp_i p_score[i, j] - p_score[j, j] ]
        # Computed on the transposed tile v_t @ s^T (second tiny MXU matmul)
        # so the logsumexp is a lane-axis reduction; the diagonal term reuses
        # diag_vals (== log(nu)).
        row_a = lax.broadcasted_iota(jnp.int32, (a, a), 0)
        col_a = lax.broadcasted_iota(jnp.int32, (a, a), 1)
        diag_a = row_a == col_a
        p_tT = jnp.dot(vt_ref[...], sT_ref[...],
                       preferred_element_type=jnp.float32)                    # (A, A)
        p_tT = p_tT - jnp.where(diag_a, 1.0, 0.0)
        row_max = jnp.max(p_tT, axis=1, keepdims=True)
        lse = jnp.log(jnp.sum(jnp.exp(p_tT - row_max),
                              axis=1, keepdims=True)) + row_max               # (A, 1)
        loss = loss + jnp.mean(lse) - jnp.mean(diag_vals)

    loss_ref[0, 0] = loss


def _round_up(x, m):
    return ((x + m - 1) // m) * m


def bert_batch_bias_hard_forward(s, v_h, v_t, v_e_hard, prob, *, plus=True):
    """Returns (loss, p_score[:, :A]) exactly like the PyTorch module."""
    a, b = v_h.shape
    h = v_e_hard.shape[0]
    a_pad = _round_up(a, 128)       # lane-dense logits block
    t_pad = _round_up(a + h, 128)   # lane-dense fused negatives tail

    # Pre-transposed (B, .) candidate matrices -> canonical MXU operands.
    #   * v_t block zero-padded to a_pad lanes (lane-dense output store).
    #   * v_h / v_e_hard fused into a single zero-padded (B, Tpad) tail so the
    #     kernel runs one full-lane MXU pass for all negatives.
    # The full (N, B) v_h_t concat is never materialized in HBM.
    s_t = jnp.swapaxes(s, 0, 1)                               # (B, A)
    vt_t = jnp.swapaxes(v_t, 0, 1)                            # (B, A)
    vt_t_pad = jnp.pad(vt_t, ((0, 0), (0, a_pad - a)))        # (B, Apad)
    tail_t = jnp.concatenate(
        [jnp.swapaxes(v_h, 0, 1), jnp.swapaxes(v_e_hard, 0, 1)], axis=1)  # (B, A+H)
    tail_t_pad = jnp.pad(tail_t, ((0, 0), (0, t_pad - (a + h))))          # (B, Tpad)

    prob_t = jnp.pad(prob[:, :a], ((0, 0), (0, a_pad - a)))               # (A, Apad)
    prob_tail = jnp.pad(prob[:, a:], ((0, 0), (0, t_pad - (a + h))))      # (A, Tpad)

    flops = 2 * a * b * (a_pad + t_pad) + (2 * a * a * b if plus else 0)
    transcendentals = a * (a_pad + t_pad) + (a * a if plus else 0) + 4 * a
    bytes_accessed = 4 * (s.size + s_t.size + v_t.size + vt_t_pad.size
                          + tail_t_pad.size + prob_t.size + prob_tail.size
                          + a * a_pad + 1)

    loss, pscore_pad = pl.pallas_call(
        functools.partial(_bert_bias_hard_kernel, num_neg=float(b), plus=plus),
        out_shape=(
            jax.ShapeDtypeStruct((1, 1), jnp.float32),        # loss
            jax.ShapeDtypeStruct((a, a_pad), jnp.float32),    # lane-padded p_score[:, :A]
        ),
        in_specs=[pl.BlockSpec(memory_space=pltpu.MemorySpace.VMEM)] * 7,
        out_specs=(
            pl.BlockSpec(memory_space=pltpu.MemorySpace.SMEM),
            pl.BlockSpec(memory_space=pltpu.MemorySpace.VMEM),
        ),
        compiler_params=pltpu.CompilerParams(vmem_limit_bytes=32 * 1024 * 1024),
        cost_estimate=pl.CostEstimate(flops=int(flops),
                                      transcendentals=int(transcendentals),
                                      bytes_accessed=int(bytes_accessed)),
    )(s, s_t, v_t, vt_t_pad, tail_t_pad, prob_t, prob_tail)
    return loss[0, 0], pscore_pad[:, :a]


def _reference(s, v_h, v_t, v_e_hard, prob, *, plus=True):
    """Pure-JAX reference mirroring the PyTorch forward."""
    a, b = v_h.shape
    vht = jnp.concatenate([v_t, v_h, v_e_hard], 0)
    p = s @ vht.T
    p = p.at[jnp.arange(a), jnp.arange(a)].add(-1.0)
    nu = jnp.exp(p)[jnp.arange(a), jnp.arange(a)]
    de = jnp.sum(jnp.exp(p) * prob, axis=1) - nu
    loss = -jnp.mean(jnp.log(nu / (nu + b * de)))
    if plus:
        logits_t = p[:, :a].T
        lse = jax.scipy.special.logsumexp(logits_t, axis=1)
        ce = jnp.mean(lse - logits_t[jnp.arange(a), jnp.arange(a)])
        loss = loss + ce
    return loss, p[:, :a]


if __name__ == "__main__":
    A, B, H = 16, 64, 5  # batch, hidden, number of hard negatives (hard_size=5)
    key = jax.random.PRNGKey(0)
    k1, k2, k3, k4, k5 = jax.random.split(key, 5)

    s = 0.1 * jax.random.normal(k1, (A, B), dtype=jnp.float32)
    v_h = 0.1 * jax.random.normal(k2, (A, B), dtype=jnp.float32)
    v_t = 0.1 * jax.random.normal(k3, (A, B), dtype=jnp.float32)
    v_e_hard = 0.1 * jax.random.normal(k4, (H, B), dtype=jnp.float32)
    prob = jax.random.uniform(k5, (A, 2 * A + H), dtype=jnp.float32)

    loss, pscore_a = bert_batch_bias_hard_forward(s, v_h, v_t, v_e_hard, prob,
                                                  plus=True)
    jax.block_until_ready((loss, pscore_a))

    ref_loss, ref_pscore = _reference(s, v_h, v_t, v_e_hard, prob, plus=True)
    assert jnp.allclose(loss, ref_loss, atol=1e-5, rtol=1e-5)
    assert jnp.allclose(pscore_a, ref_pscore, atol=1e-5, rtol=1e-5)

    print("KERNEL_OK")
</pallas_src>

<mosaic_0001>
module attributes {stable_mosaic.version = 11 : i64} {
  func.func @_bert_bias_hard_kernel(%arg0: memref<16x64xf32, #tpu.memory_space<vmem>>, %arg1: memref<64x16xf32, #tpu.memory_space<vmem>>, %arg2: memref<16x64xf32, #tpu.memory_space<vmem>>, %arg3: memref<64x128xf32, #tpu.memory_space<vmem>>, %arg4: memref<64x128xf32, #tpu.memory_space<vmem>>, %arg5: memref<16x128xf32, #tpu.memory_space<vmem>>, %arg6: memref<16x128xf32, #tpu.memory_space<vmem>>, %arg7: memref<1x1xf32, #tpu.memory_space<smem>>, %arg8: memref<16x128xf32, #tpu.memory_space<vmem>>) attributes {dimension_semantics = [], scalar_prefetch = 0 : i64, scratch_operands = 0 : i64, tpu.core_type = #tpu.core_type<tc>} {
    %c0 = arith.constant 0 : index
    %c0_0 = arith.constant 0 : index
    %0 = vector.load %arg0[%c0, %c0_0] : memref<16x64xf32, #tpu.memory_space<vmem>>, vector<16x64xf32>
    %c0_1 = arith.constant 0 : index
    %c0_2 = arith.constant 0 : index
    %1 = vector.load %arg3[%c0_1, %c0_2] : memref<64x128xf32, #tpu.memory_space<vmem>>, vector<64x128xf32>
    %cst = arith.constant dense<0.000000e+00> : vector<16x128xf32>
    %2 = tpu.matmul %0, %1, %cst {dimension_numbers = #tpu.dot_dimension_numbers<[1], [0], [0], [1], [0, 0, 1, 1], [], []>} : vector<16x64xf32>, vector<64x128xf32>, vector<16x128xf32> -> vector<16x128xf32>
    %c0_3 = arith.constant 0 : index
    %c0_4 = arith.constant 0 : index
    %3 = vector.load %arg4[%c0_3, %c0_4] : memref<64x128xf32, #tpu.memory_space<vmem>>, vector<64x128xf32>
    %cst_5 = arith.constant dense<0.000000e+00> : vector<16x128xf32>
    %4 = tpu.matmul %0, %3, %cst_5 {dimension_numbers = #tpu.dot_dimension_numbers<[1], [0], [0], [1], [0, 0, 1, 1], [], []>} : vector<16x64xf32>, vector<64x128xf32>, vector<16x128xf32> -> vector<16x128xf32>
    %5 = tpu.iota {dimensions = array<i32: 0>} : vector<16x128xi32>
    %6 = tpu.iota {dimensions = array<i32: 1>} : vector<16x128xi32>
    %7 = arith.cmpi eq, %5, %6 : vector<16x128xi32>
    %cst_6 = arith.constant 1.000000e+00 : f32
    %cst_7 = arith.constant 0.000000e+00 : f32
    %8 = vector.broadcast %cst_6 : f32 to vector<16x128xf32>
    %9 = vector.broadcast %cst_7 : f32 to vector<16x128xf32>
    %10 = arith.select %7, %8, %9 : vector<16x128xi1>, vector<16x128xf32>
    %11 = arith.subf %2, %10 : vector<16x128xf32>
    %c0_8 = arith.constant 0 : index
    %c0_9 = arith.constant 0 : index
    %12 = vector.load %arg8[%c0_8, %c0_9] : memref<16x128xf32, #tpu.memory_space<vmem>>, vector<16x128xf32>
    tpu.vector_store %arg8[%c0_8, %c0_9], %11 {strides = array<i32>} : memref<16x128xf32, #tpu.memory_space<vmem>>, vector<16x128xf32>,
    %cst_10 = arith.constant 0.000000e+00 : f32
    %13 = vector.broadcast %cst_10 : f32 to vector<16x128xf32>
    %14 = arith.select %7, %11, %13 : vector<16x128xi1>, vector<16x128xf32>
    %cst_11 = arith.constant dense<0.000000e+00> : vector<16xf32>
    %15 = vector.multi_reduction <add>, %14, %cst_11 [1] : vector<16x128xf32> to vector<16xf32>
    %16 = vector.shape_cast %15 : vector<16xf32> to vector<16x1xf32>
    %17 = math.exp %16 : vector<16x1xf32>
    %18 = math.exp %11 : vector<16x128xf32>
    %c0_12 = arith.constant 0 : index
    %c0_13 = arith.constant 0 : index
    %19 = vector.load %arg5[%c0_12, %c0_13] : memref<16x128xf32, #tpu.memory_space<vmem>>, vector<16x128xf32>
    %20 = arith.mulf %18, %19 : vector<16x128xf32>
    %cst_14 = arith.constant dense<0.000000e+00> : vector<16xf32>
    %21 = vector.multi_reduction <add>, %20, %cst_14 [1] : vector<16x128xf32> to vector<16xf32>
    %22 = vector.shape_cast %21 : vector<16xf32> to vector<16x1xf32>
    %23 = math.exp %4 : vector<16x128xf32>
    %c0_15 = arith.constant 0 : index
    %c0_16 = arith.constant 0 : index
    %24 = vector.load %arg6[%c0_15, %c0_16] : memref<16x128xf32, #tpu.memory_space<vmem>>, vector<16x128xf32>
    %25 = arith.mulf %23, %24 : vector<16x128xf32>
    %cst_17 = arith.constant dense<0.000000e+00> : vector<16xf32>
    %26 = vector.multi_reduction <add>, %25, %cst_17 [1] : vector<16x128xf32> to vector<16xf32>
    %27 = vector.shape_cast %26 : vector<16xf32> to vector<16x1xf32>
    %28 = arith.addf %22, %27 : vector<16x1xf32>
    %29 = arith.subf %28, %17 : vector<16x1xf32>
    %cst_18 = arith.constant 6.400000e+01 : f32
    %30 = vector.broadcast %cst_18 : f32 to vector<16x1xf32>
    %31 = arith.mulf %30, %29 : vector<16x1xf32>
    %32 = arith.addf %17, %31 : vector<16x1xf32>
    %33 = arith.divf %17, %32 : vector<16x1xf32>
    %34 = math.log %33 : vector<16x1xf32>
    %35 = vector.shape_cast %34 : vector<16x1xf32> to vector<1x16x1xf32>
    %cst_19 = arith.constant dense<0.000000e+00> : vector<1xf32>
    %36 = vector.multi_reduction <add>, %35, %cst_19 [1, 2] : vector<1x16x1xf32> to vector<1xf32>
    %37 = vector.shape_cast %36 : vector<1xf32> to vector<1x1x1xf32>
    %38 = vector.extract %37[0, 0, 0] : f32 from vector<1x1x1xf32>
    %cst_20 = arith.constant 1.600000e+01 : f32
    %39 = arith.divf %38, %cst_20 : f32
    %cst_21 = arith.constant 0.000000e+00 : f32
    %40 = arith.subf %cst_21, %39 : f32
    %41 = tpu.iota {dimensions = array<i32: 0>} : vector<16x16xi32>
    %42 = tpu.iota {dimensions = array<i32: 1>} : vector<16x16xi32>
    %43 = arith.cmpi eq, %41, %42 : vector<16x16xi32>
    %c0_22 = arith.constant 0 : index
    %c0_23 = arith.constant 0 : index
    %44 = vector.load %arg2[%c0_22, %c0_23] : memref<16x64xf32, #tpu.memory_space<vmem>>, vector<16x64xf32>
    %c0_24 = arith.constant 0 : index
    %c0_25 = arith.constant 0 : index
    %45 = vector.load %arg1[%c0_24, %c0_25] : memref<64x16xf32, #tpu.memory_space<vmem>>, vector<64x16xf32>
    %cst_26 = arith.constant dense<0.000000e+00> : vector<16x16xf32>
    %46 = tpu.matmul %44, %45, %cst_26 {dimension_numbers = #tpu.dot_dimension_numbers<[1], [0], [0], [1], [0, 0, 1, 1], [], []>} : vector<16x64xf32>, vector<64x16xf32>, vector<16x16xf32> -> vector<16x16xf32>
    %cst_27 = arith.constant 1.000000e+00 : f32
    %cst_28 = arith.constant 0.000000e+00 : f32
    %47 = vector.broadcast %cst_27 : f32 to vector<16x16xf32>
    %48 = vector.broadcast %cst_28 : f32 to vector<16x16xf32>
    %49 = arith.select %43, %47, %48 : vector<16x16xi1>, vector<16x16xf32>
    %50 = arith.subf %46, %49 : vector<16x16xf32>
    %cst_29 = arith.constant dense<0xFF800000> : vector<16xf32>
    %51 = vector.multi_reduction <maximumf>, %50, %cst_29 [1] : vector<16x16xf32> to vector<16xf32>
    %52 = vector.shape_cast %51 : vector<16xf32> to vector<16x1xf32>
    %53 = vector.broadcast %52 : vector<16x1xf32> to vector<16x16xf32>
    %54 = arith.subf %50, %53 : vector<16x16xf32>
    %55 = math.exp %54 : vector<16x16xf32>
    %cst_30 = arith.constant dense<0.000000e+00> : vector<16xf32>
    %56 = vector.multi_reduction <add>, %55, %cst_30 [1] : vector<16x16xf32> to vector<16xf32>
    %57 = vector.shape_cast %56 : vector<16xf32> to vector<16x1xf32>
    %58 = math.log %57 : vector<16x1xf32>
    %59 = arith.addf %58, %52 : vector<16x1xf32>
    %60 = vector.shape_cast %59 : vector<16x1xf32> to vector<1x16x1xf32>
    %cst_31 = arith.constant dense<0.000000e+00> : vector<1xf32>
    %61 = vector.multi_reduction <add>, %60, %cst_31 [1, 2] : vector<1x16x1xf32> to vector<1xf32>
    %62 = vector.shape_cast %61 : vector<1xf32> to vector<1x1x1xf32>
    %63 = vector.extract %62[0, 0, 0] : f32 from vector<1x1x1xf32>
    %cst_32 = arith.constant 1.600000e+01 : f32
    %64 = arith.divf %63, %cst_32 : f32
    %65 = arith.addf %40, %64 : f32
    %66 = vector.shape_cast %16 : vector<16x1xf32> to vector<1x16x1xf32>
    %cst_33 = arith.constant dense<0.000000e+00> : vector<1xf32>
    %67 = vector.multi_reduction <add>, %66, %cst_33 [1, 2] : vector<1x16x1xf32> to vector<1xf32>
    %68 = vector.shape_cast %67 : vector<1xf32> to vector<1x1x1xf32>
    %69 = vector.extract %68[0, 0, 0] : f32 from vector<1x1x1xf32>
    %cst_34 = arith.constant 1.600000e+01 : f32
    %70 = arith.divf %69, %cst_34 : f32
    %71 = arith.subf %65, %70 : f32
    %c0_35 = arith.constant 0 : index
    %c0_36 = arith.constant 0 : index
    %72 = memref.load %arg7[%c0_35, %c0_36] : memref<1x1xf32, #tpu.memory_space<smem>>
    memref.store %71, %arg7[%c0_35, %c0_36] : memref<1x1xf32, #tpu.memory_space<smem>>
    return
  }
}

</mosaic_0001>

<llo_original>
// kernel: tpu_custom_call.1
$region0: #{tpu_custom_call.1}
  #allocation0 [shape = 'u32[]', space=smem, size = 0x4, offset = 0x4, fixed_abs, tag = 'smem constant byte address 0x4 - core index']
  #allocation1 [shape = 'u32[144,128]{1,0:T(1,128)}', space=vmem, size = 0x12000, scoped, tag = 'internal scratch']
  %s0 = inlined_call_operand.vmem [shape: f32[16,64], index: 0, kind: input, shape index: {}]
  %s1 = inlined_call_operand.vmem [shape: f32[64,16], index: 1, kind: input, shape index: {}]
  %s2 = inlined_call_operand.hbm [shape: f32[16,64], index: 2, kind: input, shape index: {}]
  %s3 = inlined_call_operand.vmem [shape: f32[64,128], index: 3, kind: input, shape index: {}]
  %s4 = inlined_call_operand.hbm [shape: f32[64,128], index: 4, kind: input, shape index: {}]
  %s5 = inlined_call_operand.vmem [shape: f32[16,128], index: 5, kind: input, shape index: {}]
  %s6 = inlined_call_operand.hbm [shape: f32[16,128], index: 6, kind: input, shape index: {}]
  %s7 = inlined_call_operand.hbm [shape: f32[1,1], index: 7, kind: output, shape index: {0}]
  %s8 = inlined_call_operand.hbm [shape: f32[16,128], index: 8, kind: output, shape index: {1}]
  %9 = xla_tuple %s7, %s8
  %s10 = sld [smem:[#allocation0]]
  $region58: #{tpu_custom_call.1} parent=0
    _
  %s12 = ssub.s32 1, %s10
  %s13 = scalar_select 0, %s12, %s10
  $region1: #{tpu_custom_call.1} parent=0
    #allocation2 [shape = 'u8[8192]{0}', space=vmem, size = 0x2000, scoped, tag = 'input window, operand 2, single buffered']
    #allocation3 [shape = 's32[1]{0}', space=sflag, size = 0x4, scoped, tag = 'scoped memory for tpu_custom_call.1']
    #allocation4 [shape = 's32[1]{0}', space=sflag, size = 0x4, scoped, tag = 'scoped memory for tpu_custom_call.1']
    #allocation5 [shape = 's32[1]{0}', space=sflag, size = 0x4, scoped, tag = 'scoped memory for tpu_custom_call.1']
    #allocation6 [shape = 'u8[32768]{0}', space=vmem, size = 0x8000, scoped, tag = 'input window, operand 4, single buffered']
    #allocation7 [shape = 's32[1]{0}', space=sflag, size = 0x4, scoped, tag = 'scoped memory for tpu_custom_call.1']
    #allocation8 [shape = 'u8[8192]{0}', space=vmem, size = 0x2000, scoped, tag = 'input window, operand 6, single buffered']
    #allocation9 [shape = 'u8[512]{0}', space=smem, size = 0x200, scoped, tag = 'output window, operand 0, single buffered']
    #allocation10 [shape = 'u8[8192]{0}', space=vmem, size = 0x2000, scoped, tag = 'output window, operand 1, single buffered']
    %14 = vsyncpa [#allocation3], 0
    %15 = vsyncpa [#allocation7], 0
    %16 = vsyncpa [#allocation5], 0
    %17 = vsyncpa [#allocation4], 0
    // Predicated region
    $region2: #{tpu_custom_call.1} parent=1 // pred_check
      _
    $region3: #{tpu_custom_call.1} parent=1 // pred_check_branch
      %19 = sbr.rel (0) target = $region5
    $region4: #{tpu_custom_call.1} parent=1 // pred_region
      _
    $region5: #{tpu_custom_call.1} parent=1 // pred_fallthru
      _
    // Predicated region
    $region6: #{tpu_custom_call.1} parent=1 // pred_check
      _
    $region7: #{tpu_custom_call.1} parent=1 // pred_check_branch
      %21 = sbr.rel (0) target = $region9
    $region8: #{tpu_custom_call.1} parent=1 // pred_region
      _
    $region9: #{tpu_custom_call.1} parent=1 // pred_fallthru
      _
    // Predicated region
    $region10: #{tpu_custom_call.1} parent=1 // pred_check
      _
    $region11: #{tpu_custom_call.1} parent=1 // pred_check_branch
      %23 = sbr.rel (0) target = $region13
    $region12: #{tpu_custom_call.1} parent=1 // pred_region
      %s25 = ssub.s32 256, 256
      %26 = vsyncadd [#allocation3], %s25
      %s27 = sshll.u32 [#allocation2], 4
      %s28 = int_to_ptr.vmem [resolvable:$true] %s27
      %33 = dma.hbm_to_vmem [thread:$0]  %s2, 256, %s28, [#allocation3], 128, 128, 8
    $region13: #{tpu_custom_call.1} parent=1 // pred_fallthru
      _
    // Predicated region
    $region14: #{tpu_custom_call.1} parent=1 // pred_check
      _
    $region15: #{tpu_custom_call.1} parent=1 // pred_check_branch
      %35 = sbr.rel (0) target = $region17
    $region16: #{tpu_custom_call.1} parent=1 // pred_region
      _
    $region17: #{tpu_custom_call.1} parent=1 // pred_fallthru
      _
    // Predicated region
    $region18: #{tpu_custom_call.1} parent=1 // pred_check
      _
    $region19: #{tpu_custom_call.1} parent=1 // pred_check_branch
      %37 = sbr.rel (0) target = $region21
    $region20: #{tpu_custom_call.1} parent=1 // pred_region
      %s39 = ssub.s32 1024, 1024
      %40 = vsyncadd [#allocation7], %s39
      %s41 = sshll.u32 [#allocation6], 4
      %s42 = int_to_ptr.vmem [resolvable:$true] %s41
      %47 = dma.hbm_to_vmem [thread:$0]  %s4, 1024, %s42, [#allocation7], 128, 128, 8
    $region21: #{tpu_custom_call.1} parent=1 // pred_fallthru
      _
    // Predicated region
    $region22: #{tpu_custom_call.1} parent=1 // pred_check
      _
    $region23: #{tpu_custom_call.1} parent=1 // pred_check_branch
      %49 = sbr.rel (0) target = $region25
    $region24: #{tpu_custom_call.1} parent=1 // pred_region
      _
    $region25: #{tpu_custom_call.1} parent=1 // pred_fallthru
      _
    // Predicated region
    $region26: #{tpu_custom_call.1} parent=1 // pred_check
      _
    $region27: #{tpu_custom_call.1} parent=1 // pred_check_branch
      %51 = sbr.rel (0) target = $region29
    $region28: #{tpu_custom_call.1} parent=1 // pred_region
      %s53 = ssub.s32 256, 256
      %54 = vsyncadd [#allocation7], %s53
      %s55 = sshll.u32 [#allocation8], 4
      %s56 = int_to_ptr.vmem [resolvable:$true] %s55
      %61 = dma.hbm_to_vmem [thread:$0]  %s6, 256, %s56, [#allocation7], 128, 128, 8
    $region29: #{tpu_custom_call.1} parent=1 // pred_fallthru
      _
    // Predicated region
    $region30: #{tpu_custom_call.1} parent=1 // pred_check
      _
    $region31: #{tpu_custom_call.1} parent=1 // pred_check_branch
      %63 = sbr.rel (0) target = $region33
    $region32: #{tpu_custom_call.1} parent=1 // pred_region
      %64 = dma.done [#allocation3], 256
    $region33: #{tpu_custom_call.1} parent=1 // pred_fallthru
      _
    // Predicated region
    $region34: #{tpu_custom_call.1} parent=1 // pred_check
      _
    $region35: #{tpu_custom_call.1} parent=1 // pred_check_branch
      %66 = sbr.rel (0) target = $region37
    $region36: #{tpu_custom_call.1} parent=1 // pred_region
      %67 = dma.done [#allocation7], 1024
    $region37: #{tpu_custom_call.1} parent=1 // pred_fallthru
      _
    // Predicated region
    $region38: #{tpu_custom_call.1} parent=1 // pred_check
      _
    $region39: #{tpu_custom_call.1} parent=1 // pred_check_branch
      %69 = sbr.rel (0) target = $region41
    $region40: #{tpu_custom_call.1} parent=1 // pred_region
      %70 = dma.done [#allocation7], 256
    $region41: #{tpu_custom_call.1} parent=1 // pred_fallthru
      _
    %v71 = vld [vmem:[%s0] sm:$0xff]
    %v72 = vld [vmem:[%s0 + $0x8] sm:$0xff]
    %v73 = vld [vmem:[%s3] sm:$0xff]
    %v74 = vld [vmem:[%s3 + $0x8] sm:$0xff]
    %v75 = vld [vmem:[%s3 + $0x10] sm:$0xff]
    %v76 = vld [vmem:[%s3 + $0x18] sm:$0xff]
    %v77 = vld [vmem:[%s3 + $0x20] sm:$0xff]
    %v78 = vld [vmem:[%s3 + $0x28] sm:$0xff]
    %v79 = vld [vmem:[%s3 + $0x30] sm:$0xff]
    %v80 = vld [vmem:[%s3 + $0x38] sm:$0xff]
    %vm81 = vcmask 523264
    %v83 = vsel %vm81, %v71, 0
    %v86 = vsel %vm81, %v72, 0
    %88 = vmatprep.subr.mxu0 0.0
    %89 = vmatpush1.msra.mxu0 %v73
    %90 = vmatprep.subr.mxu0 0.0
    %91 = vmatpush1.msra.mxu0 %v74
    %92 = vmatprep.subr.mxu0 0.0
    %93 = vmatpush1.msra.mxu0 %v75
    %94 = vmatprep.subr.mxu0 0.0
    %95 = vmatpush1.msra.mxu0 %v76
    %96 = vmatprep.subr.mxu0 0.0
    %97 = vmatpush1.msra.mxu0 %v77
    %98 = vmatprep.subr.mxu0 0.0
    %99 = vmatpush1.msra.mxu0 %v78
    %100 = vmatprep.subr.mxu0 0.0
    %101 = vmatpush1.msra.mxu0 %v79
    %102 = vmatprep.subr.mxu0 0.0
    %103 = vmatpush1.msra.mxu0 %v80
    %104 = vmatprep.subr.mxu0 0.0
    %105 = vmatpush1.msra.mxu0 0.0
    %106 = vmatprep.subr.mxu0 0.0
    %107 = vmatpush1.msra.mxu0 0.0
    %108 = vmatprep.subr.mxu0 0.0
    %109 = vmatpush1.msra.mxu0 0.0
    %110 = vmatprep.subr.mxu0 0.0
    %111 = vmatpush1.msra.mxu0 0.0
    %112 = vmatprep.subr.mxu0 0.0
    %113 = vmatpush1.msra.mxu0 0.0
    %114 = vmatprep.subr.mxu0 0.0
    %115 = vmatpush1.msra.mxu0 0.0
    %116 = vmatprep.subr.mxu0 0.0
    %117 = vmatpush1.msra.mxu0 0.0
    %118 = vmatprep.subr.mxu0 0.0
    %119 = vmatpush1.msra.mxu0 0.0
    %120 = vmatprep.subr.mxu0 0.0
    %121 = vmatpush1.msra.mxu0 0.0
    %122 = vmatprep.subr.mxu0 0.0
    %123 = vmatpush1.msra.mxu0 0.0
    %124 = vmatprep.subr.mxu0 0.0
    %125 = vmatpush1.msra.mxu0 0.0
    %126 = vmatprep.subr.mxu0 0.0
    %127 = vmatpush1.msra.mxu0 0.0
    %128 = vmatprep.subr.mxu0 0.0
    %129 = vmatpush1.msra.mxu0 0.0
    %130 = vmatprep.subr.mxu0 0.0
    %131 = vmatpush1.msra.mxu0 0.0
    %132 = vmatprep.subr.mxu0 0.0
    %133 = vmatpush1.msra.mxu0 0.0
    %134 = vmatprep.subr.mxu0 0.0
    %135 = vmatpush1.msra.mxu0 0.0
    %136 = vmatprep.subr.mxu0 0.0
    %137 = vmatpush1.msra.mxu0 0.0
    %138 = vmatprep.subr.mxu0 0.0
    %139 = vmatpush1.msra.mxu0 0.0
    %140 = vmatprep.subr.mxu0 0.0
    %141 = vmatpush1.msra.mxu0 0.0
    %142 = vmatprep.subr.mxu0 0.0
    %143 = vmatpush1.msra.mxu0 0.0
    %144 = vmatprep.subr.mxu0 0.0
    %145 = vmatpush1.msra.mxu0 0.0
    %146 = vmatprep.subr.mxu0 0.0
    %147 = vmatpush1.msra.mxu0 0.0
    %148 = vmatprep.subr.mxu0 0.0
    %149 = vmatpush1.msra.mxu0 0.0
    %150 = vmatprep.subr.mxu0 0.0
    %151 = vmatpush1.msra.mxu0 0.0
    %152 = vmatprep.mubr.f32.mxu0 0.0
    %153 = vmatmul.mubr.f32.gmra.mrb[0].mxu0 %v83
    %v154 = vpop.f32.mrb[0].mxu0
    %v155 = vadd.f32 0.0, %v154
    %v156 = vpop.f32.mrb[0].mxu0
    %157 = vmatprep.mubr.f32.mxu0 0.0
    %158 = vmatmul.mubr.f32.gmra.mrb[0].mxu0 %v86
    %v159 = vpop.f32.mrb[0].mxu0
    %v160 = vadd.f32 0.0, %v159
    %v161 = vpop.f32.mrb[0].mxu0
    %162 = vdwg.mxu0
    %v163 = vld [vmem:[#allocation6] sm:$0xff]
    %v164 = vld [vmem:[#allocation6 + $0x8] sm:$0xff]
    %v165 = vld [vmem:[#allocation6 + $0x10] sm:$0xff]
    %v166 = vld [vmem:[#allocation6 + $0x18] sm:$0xff]
    %v167 = vld [vmem:[#allocation6 + $0x20] sm:$0xff]
    %v168 = vld [vmem:[#allocation6 + $0x28] sm:$0xff]
    %v169 = vld [vmem:[#allocation6 + $0x30] sm:$0xff]
    %v170 = vld [vmem:[#allocation6 + $0x38] sm:$0xff]
    %171 = vmatprep.subr.mxu0 0.0
    %172 = vmatpush1.msra.mxu0 %v163
    %173 = vmatprep.subr.mxu0 0.0
    %174 = vmatpush1.msra.mxu0 %v164
    %175 = vmatprep.subr.mxu0 0.0
    %176 = vmatpush1.msra.mxu0 %v165
    %177 = vmatprep.subr.mxu0 0.0
    %178 = vmatpush1.msra.mxu0 %v166
    %179 = vmatprep.subr.mxu0 0.0
    %180 = vmatpush1.msra.mxu0 %v167
    %181 = vmatprep.subr.mxu0 0.0
    %182 = vmatpush1.msra.mxu0 %v168
    %183 = vmatprep.subr.mxu0 0.0
    %184 = vmatpush1.msra.mxu0 %v169
    %185 = vmatprep.subr.mxu0 0.0
    %186 = vmatpush1.msra.mxu0 %v170
    %187 = vmatprep.subr.mxu0 0.0
    %188 = vmatpush1.msra.mxu0 0.0
    %189 = vmatprep.subr.mxu0 0.0
    %190 = vmatpush1.msra.mxu0 0.0
    %191 = vmatprep.subr.mxu0 0.0
    %192 = vmatpush1.msra.mxu0 0.0
    %193 = vmatprep.subr.mxu0 0.0
    %194 = vmatpush1.msra.mxu0 0.0
    %195 = vmatprep.subr.mxu0 0.0
    %196 = vmatpush1.msra.mxu0 0.0
    %197 = vmatprep.subr.mxu0 0.0
    %198 = vmatpush1.msra.mxu0 0.0
    %199 = vmatprep.subr.mxu0 0.0
    %200 = vmatpush1.msra.mxu0 0.0
    %201 = vmatprep.subr.mxu0 0.0
    %202 = vmatpush1.msra.mxu0 0.0
    %203 = vmatprep.subr.mxu0 0.0
    %204 = vmatpush1.msra.mxu0 0.0
    %205 = vmatprep.subr.mxu0 0.0
    %206 = vmatpush1.msra.mxu0 0.0
    %207 = vmatprep.subr.mxu0 0.0
    %208 = vmatpush1.msra.mxu0 0.0
    %209 = vmatprep.subr.mxu0 0.0
    %210 = vmatpush1.msra.mxu0 0.0
    %211 = vmatprep.subr.mxu0 0.0
    %212 = vmatpush1.msra.mxu0 0.0
    %213 = vmatprep.subr.mxu0 0.0
    %214 = vmatpush1.msra.mxu0 0.0
    %215 = vmatprep.subr.mxu0 0.0
    %216 = vmatpush1.msra.mxu0 0.0
    %217 = vmatprep.subr.mxu0 0.0
    %218 = vmatpush1.msra.mxu0 0.0
    %219 = vmatprep.subr.mxu0 0.0
    %220 = vmatpush1.msra.mxu0 0.0
    %221 = vmatprep.subr.mxu0 0.0
    %222 = vmatpush1.msra.mxu0 0.0
    %223 = vmatprep.subr.mxu0 0.0
    %224 = vmatpush1.msra.mxu0 0.0
    %225 = vmatprep.subr.mxu0 0.0
    %226 = vmatpush1.msra.mxu0 0.0
    %227 = vmatprep.subr.mxu0 0.0
    %228 = vmatpush1.msra.mxu0 0.0
    %229 = vmatprep.subr.mxu0 0.0
    %230 = vmatpush1.msra.mxu0 0.0
    %231 = vmatprep.subr.mxu0 0.0
    %232 = vmatpush1.msra.mxu0 0.0
    %233 = vmatprep.subr.mxu0 0.0
    %234 = vmatpush1.msra.mxu0 0.0
    %235 = vmatprep.mubr.f32.mxu0 0.0
    %236 = vmatmul.mubr.f32.gmra.mrb[0].mxu0 %v83
    %v237 = vpop.f32.mrb[0].mxu0
    %v238 = vadd.f32 0.0, %v237
    %v239 = vpop.f32.mrb[0].mxu0
    %240 = vmatprep.mubr.f32.mxu0 0.0
    %241 = vmatmul.mubr.f32.gmra.mrb[0].mxu0 %v86
    %v242 = vpop.f32.mrb[0].mxu0
    %v243 = vadd.f32 0.0, %v242
    %v244 = vpop.f32.mrb[0].mxu0
    %245 = vdwg.mxu0
    %v246 = vlaneseq
    %v247 = vshrl.u32 %v246, 7
    %v248 = vadd.s32 %v247, 8
    %v249 = vlaneseq
    %v250 = vand.u32 %v249, 127
    %vm251 = vcmp.eq.s32.totalorder %v247, %v250
    %vm252 = vcmp.eq.s32.totalorder %v248, %v250
    %v253 = vsel %vm251, 1.0, 0.0
    %v254 = vsel %vm252, 1.0, 0.0
    %v255 = vsub.f32 %v155, %v253
    %v256 = vsub.f32 %v160, %v254
    %257 = vst [vmem:[#allocation10] sm:$0xff] %v255
    %258 = vst [vmem:[#allocation10 + $0x8] sm:$0xff] %v256
    %v259 = vsel %vm251, %v255, 0.0
    %v260 = vsel %vm252, %v256, 0.0
    %261 = vadd.xlane.f32.xlu0 %v259
    %v262 = vpop.xlane.xlu0 %261
    %263 = vadd.xlane.f32.xlu0 %v260
    %v264 = vpop.xlane.xlu0 %263
    %v265 = vmul.f32 %v262, 1.442695
    %v266 = vpow.pop %v265
    %v267 = vmul.f32 %v264, 1.442695
    %v268 = vpow.pop %v267
    %v269 = vmul.f32 %v255, 1.442695
    %v270 = vpow.pop %v269
    %v271 = vmul.f32 %v256, 1.442695
    %v272 = vpow.pop %v271
    %v273 = vld [vmem:[%s5] sm:$0xff]
    %v274 = vld [vmem:[%s5 + $0x8] sm:$0xff]
    %v275 = vmul.f32 %v270, %v273
    %v276 = vmul.f32 %v272, %v274
    %277 = vadd.xlane.f32.xlu0 %v275
    %v278 = vpop.xlane.xlu0 %277
    %279 = vadd.xlane.f32.xlu0 %v276
    %v280 = vpop.xlane.xlu0 %279
    %v281 = vmul.f32 %v238, 1.442695
    %v282 = vpow.pop %v281
    %v283 = vmul.f32 %v243, 1.442695
    %v284 = vpow.pop %v283
    %v285 = vld [vmem:[#allocation8] sm:$0xff]
    %v286 = vld [vmem:[#allocation8 + $0x8] sm:$0xff]
    %v287 = vmul.f32 %v282, %v285
    %v288 = vmul.f32 %v284, %v286
    %289 = vadd.xlane.f32.xlu0 %v287
    %v290 = vpop.xlane.xlu0 %289
    %291 = vadd.xlane.f32.xlu0 %v288
    %v292 = vpop.xlane.xlu0 %291
    %v293 = vadd.f32 %v278, %v290
    %v294 = vadd.f32 %v280, %v292
    %v295 = vsub.f32 %v293, %v266
    %v296 = vsub.f32 %v294, %v268
    %v297 = vmul.f32 %v295, 64.0
    %v298 = vmul.f32 %v296, 64.0
    %v299 = vadd.f32 %v266, %v297
    %v300 = vadd.f32 %v268, %v298
    %v301 = vrcp.pop %v299
    %v302 = vmul.f32 %v266, %v301
    %v303 = vrcp.pop %v300
    %v304 = vmul.f32 %v268, %v303
    %v305 = vlog2.pop %v302
    %v306 = vmul.f32 %v305, 0.6931472
    %v307 = vlog2.pop %v304
    %v308 = vmul.f32 %v307, 0.6931472
    %vm309 = vcmask 7168
    %v310 = vsel %vm309, %v306, 0.0
    %v311 = vsel %vm309, %v308, 0.0
    %v312 = vadd.f32 %v310, %v311
    %313 = vadd.xlane.f32.xlu0 %v312
    %v314 = vpop.xlane.xlu0 %313
    %v315 = vrot.slane %v314, 4
    %v316 = vadd.f32 %v314, %v315
    %v317 = vrot.slane %v316, 2
    %v318 = vadd.f32 %v316, %v317
    %v319 = vrot.slane %v318, 1
    %v320 = vadd.f32 %v318, %v319
    %s321 = vtos %v320
    %v322 = vrcp.pop 16.0
    %s323 = vtos %v322
    %s324 = smul.f32 %s321, %s323
    %s325 = ssub.f32 0.0, %s324
    %v326 = vld [vmem:[#allocation2] sm:$0xff]
    %v327 = vld [vmem:[#allocation2 + $0x8] sm:$0xff]
    %v328 = vld [vmem:[%s1] sm:$0xff]
    %v329 = vld [vmem:[%s1 + $0x8] sm:$0xff]
    %v330 = vld [vmem:[%s1 + $0x10] sm:$0xff]
    %v331 = vld [vmem:[%s1 + $0x18] sm:$0xff]
    %v332 = vld [vmem:[%s1 + $0x20] sm:$0xff]
    %v333 = vld [vmem:[%s1 + $0x28] sm:$0xff]
    %v334 = vld [vmem:[%s1 + $0x30] sm:$0xff]
    %v335 = vld [vmem:[%s1 + $0x38] sm:$0xff]
    %v337 = vsel %vm81, %v326, 0
    %v340 = vsel %vm81, %v327, 0
    %342 = vmatprep.subr.mxu0 0.0
    %343 = vmatpush1.msra.mxu0 %v328
    %344 = vmatprep.subr.mxu0 0.0
    %345 = vmatpush1.msra.mxu0 %v329
    %346 = vmatprep.subr.mxu0 0.0
    %347 = vmatpush1.msra.mxu0 %v330
    %348 = vmatprep.subr.mxu0 0.0
    %349 = vmatpush1.msra.mxu0 %v331
    %350 = vmatprep.subr.mxu0 0.0
    %351 = vmatpush1.msra.mxu0 %v332
    %352 = vmatprep.subr.mxu0 0.0
    %353 = vmatpush1.msra.mxu0 %v333
    %354 = vmatprep.subr.mxu0 0.0
    %355 = vmatpush1.msra.mxu0 %v334
    %356 = vmatprep.subr.mxu0 0.0
    %357 = vmatpush1.msra.mxu0 %v335
    %358 = vmatprep.subr.mxu0 0.0
    %359 = vmatpush1.msra.mxu0 0.0
    %360 = vmatprep.subr.mxu0 0.0
    %361 = vmatpush1.msra.mxu0 0.0
    %362 = vmatprep.subr.mxu0 0.0
    %363 = vmatpush1.msra.mxu0 0.0
    %364 = vmatprep.subr.mxu0 0.0
    %365 = vmatpush1.msra.mxu0 0.0
    %366 = vmatprep.subr.mxu0 0.0
    %367 = vmatpush1.msra.mxu0 0.0
    %368 = vmatprep.subr.mxu0 0.0
    %369 = vmatpush1.msra.mxu0 0.0
    %370 = vmatprep.subr.mxu0 0.0
    %371 = vmatpush1.msra.mxu0 0.0
    %372 = vmatprep.subr.mxu0 0.0
    %373 = vmatpush1.msra.mxu0 0.0
    %374 = vmatprep.subr.mxu0 0.0
    %375 = vmatpush1.msra.mxu0 0.0
    %376 = vmatprep.subr.mxu0 0.0
    %377 = vmatpush1.msra.mxu0 0.0
    %378 = vmatprep.subr.mxu0 0.0
    %379 = vmatpush1.msra.mxu0 0.0
    %380 = vmatprep.subr.mxu0 0.0
    %381 = vmatpush1.msra.mxu0 0.0
    %382 = vmatprep.subr.mxu0 0.0
    %383 = vmatpush1.msra.mxu0 0.0
    %384 = vmatprep.subr.mxu0 0.0
    %385 = vmatpush1.msra.mxu0 0.0
    %386 = vmatprep.subr.mxu0 0.0
    %387 = vmatpush1.msra.mxu0 0.0
    %388 = vmatprep.subr.mxu0 0.0
    %389 = vmatpush1.msra.mxu0 0.0
    %390 = vmatprep.subr.mxu0 0.0
    %391 = vmatpush1.msra.mxu0 0.0
    %392 = vmatprep.subr.mxu0 0.0
    %393 = vmatpush1.msra.mxu0 0.0
    %394 = vmatprep.subr.mxu0 0.0
    %395 = vmatpush1.msra.mxu0 0.0
    %396 = vmatprep.subr.mxu0 0.0
    %397 = vmatpush1.msra.mxu0 0.0
    %398 = vmatprep.subr.mxu0 0.0
    %399 = vmatpush1.msra.mxu0 0.0
    %400 = vmatprep.subr.mxu0 0.0
    %401 = vmatpush1.msra.mxu0 0.0
    %402 = vmatprep.subr.mxu0 0.0
    %403 = vmatpush1.msra.mxu0 0.0
    %404 = vmatprep.subr.mxu0 0.0
    %405 = vmatpush1.msra.mxu0 0.0
    %406 = vmatprep.mubr.f32.mxu0 0.0
    %407 = vmatmul.mubr.f32.gmra.mrb[0].mxu0 %v337
    %v408 = vpop.f32.mrb[0].mxu0
    %v409 = vadd.f32 0.0, %v408
    %v410 = vpop.f32.mrb[0].mxu0
    %411 = vmatprep.mubr.f32.mxu0 0.0
    %412 = vmatmul.mubr.f32.gmra.mrb[0].mxu0 %v340
    %v413 = vpop.f32.mrb[0].mxu0
    %v414 = vadd.f32 0.0, %v413
    %v415 = vpop.f32.mrb[0].mxu0
    %416 = vdwg.mxu0
    %v417 = vsub.f32 %v409, %v253
    %v418 = vsub.f32 %v414, %v254
    %vm419 = vcmask 130048
    %v420 = vsel %vm419, %v417, -inf
    %421 = vmax.xlane.f32.xlu0 %v420
    %v422 = vpop.xlane.xlu0 %421
    %v423 = vsel %vm419, %v418, -inf
    %424 = vmax.xlane.f32.xlu0 %v423
    %v425 = vpop.xlane.xlu0 %424
    %v426 = vsub.f32 %v417, %v422
    %v427 = vsub.f32 %v418, %v425
    %v428 = vmul.f32 %v426, 1.442695
    %v429 = vpow.pop %v428
    %v430 = vmul.f32 %v427, 1.442695
    %v431 = vpow.pop %v430
    %v432 = vsel %vm419, %v429, 0.0
    %433 = vadd.xlane.f32.xlu0 %v432
    %v434 = vpop.xlane.xlu0 %433
    %v435 = vsel %vm419, %v431, 0.0
    %436 = vadd.xlane.f32.xlu0 %v435
    %v437 = vpop.xlane.xlu0 %436
    %v438 = vlog2.pop %v434
    %v439 = vmul.f32 %v438, 0.6931472
    %v440 = vlog2.pop %v437
    %v441 = vmul.f32 %v440, 0.6931472
    %v442 = vadd.f32 %v439, %v422
    %v443 = vadd.f32 %v441, %v425
    %v444 = vsel %vm309, %v442, 0.0
    %v445 = vsel %vm309, %v443, 0.0
    %v446 = vadd.f32 %v444, %v445
    %447 = vadd.xlane.f32.xlu0 %v446
    %v448 = vpop.xlane.xlu0 %447
    %v449 = vrot.slane %v448, 4
    %v450 = vadd.f32 %v448, %v449
    %v451 = vrot.slane %v450, 2
    %v452 = vadd.f32 %v450, %v451
    %v453 = vrot.slane %v452, 1
    %v454 = vadd.f32 %v452, %v453
    %s455 = vtos %v454
    %v456 = vrcp.pop 16.0
    %s457 = vtos %v456
    %s458 = smul.f32 %s455, %s457
    %s459 = sadd.f32 %s325, %s458
    %v460 = vsel %vm309, %v262, 0.0
    %v461 = vsel %vm309, %v264, 0.0
    %v462 = vadd.f32 %v460, %v461
    %463 = vadd.xlane.f32.xlu0 %v462
    %v464 = vpop.xlane.xlu0 %463
    %v465 = vrot.slane %v464, 4
    %v466 = vadd.f32 %v464, %v465
    %v467 = vrot.slane %v466, 2
    %v468 = vadd.f32 %v466, %v467
    %v469 = vrot.slane %v468, 1
    %v470 = vadd.f32 %v468, %v469
    %s471 = vtos %v470
    %v472 = vrcp.pop 16.0
    %s473 = vtos %v472
    %s474 = smul.f32 %s471, %s473
    %s475 = ssub.f32 %s459, %s474
    %s476 = scalar_lea.smem [#allocation9], 0
    %477 = sst [smem:[%s476]] %s475
    // Predicated region
    $region42: #{tpu_custom_call.1} parent=1 // pred_check
      _
    $region43: #{tpu_custom_call.1} parent=1 // pred_check_branch
      %479 = sbr.rel (0) target = $region45
    $region44: #{tpu_custom_call.1} parent=1 // pred_region
      %s481 = ssub.s32 16, 16
      %482 = vsyncadd [#allocation5], %s481
      %485 = dma.smem_to_hbm [#allocation9], 16, %s7, [#allocation5]
    $region45: #{tpu_custom_call.1} parent=1 // pred_fallthru
      _
    // Predicated region
    $region46: #{tpu_custom_call.1} parent=1 // pred_check
      _
    $region47: #{tpu_custom_call.1} parent=1 // pred_check_branch
      %487 = sbr.rel (0) target = $region49
    $region48: #{tpu_custom_call.1} parent=1 // pred_region
      %s489 = ssub.s32 256, 256
      %490 = vsyncadd [#allocation4], %s489
      %s491 = sshll.u32 [#allocation10], 4
      %s492 = int_to_ptr.vmem [resolvable:$true] %s491
      %497 = dma.vmem_to_hbm [thread:$0]  %s492, 256, %s8, [#allocation4], 128, 128, 8
    $region49: #{tpu_custom_call.1} parent=1 // pred_fallthru
      _
    // Predicated region
    $region50: #{tpu_custom_call.1} parent=1 // pred_check
      _
    $region51: #{tpu_custom_call.1} parent=1 // pred_check_branch
      %499 = sbr.rel (0) target = $region53
    $region52: #{tpu_custom_call.1} parent=1 // pred_region
      %500 = dma.done [#allocation5], 16
    $region53: #{tpu_custom_call.1} parent=1 // pred_fallthru
      _
    // Predicated region
    $region54: #{tpu_custom_call.1} parent=1 // pred_check
      _
    $region55: #{tpu_custom_call.1} parent=1 // pred_check_branch
      %502 = sbr.rel (0) target = $region57
    $region56: #{tpu_custom_call.1} parent=1 // pred_region
      %503 = dma.done [#allocation4], 256
    $region57: #{tpu_custom_call.1} parent=1 // pred_fallthru
      _
    %504 = sfence
    %505 = vsyncpa [#allocation3], 1
    %506 = vsyncpa [#allocation7], 1
    %507 = vsyncpa [#allocation4], 1
    %508 = vsyncpa [#allocation5], 1

</llo_original>
